<compile_context>
chip_gen: v7x
topology: tpu7x:2x2x1
jax: 0.10.0
libtpu: 0.0.40
codegen_flags: <defaults>
</compile_context>

<pallas_src>
import functools

import jax
import jax.numpy as jnp
from jax.experimental import pallas as pl
from jax.experimental.pallas import tpu as pltpu

_LANES = 128
_MAX_BLOCK_BYTES = 4 * 1024 * 1024      # target size of one (8, rb, 128) input block
_VMEM_LIMIT_BYTES = 32 * 1024 * 1024    # explicit scoped-VMEM budget (safe all gens)
_MIN_PALLAS_BOXES = 16384               # below this, fused XLA beats layout+launch


def _cdiv(a, b):
    return -(-a // b)


def _precise_reciprocal(x):
    """EUP approx reciprocal + one Newton-Raphson step (< ~1e-6 rel error)."""
    inv = pl.reciprocal(x, approx=True)
    return inv * (2.0 - x * inv)


def _block_loss(boxes_ref):
    """boxes_ref: (8, rb, 128) VMEM block.  rows 0..3 pred(x0,y0,x1,y1),
    rows 4..7 gt.  Returns the per-element GIoU loss, shape (rb, 128) f32."""

    def plane(k):
        # Per-plane upcast: never materializes a full 8-plane f32 temporary.
        return boxes_ref[k].astype(jnp.float32)

    px0, py0, px1, py1 = plane(0), plane(1), plane(2), plane(3)
    gx0, gy0, gx1, gy1 = plane(4), plane(5), plane(6), plane(7)

    # intersection
    w_i = jnp.maximum(jnp.minimum(gx1, px1) - jnp.maximum(gx0, px0), 0.0)
    h_i = jnp.maximum(jnp.minimum(gy1, py1) - jnp.maximum(gy0, py0), 0.0)
    inter = w_i * h_i

    # union (no eps, matching the PyTorch reference semantics)
    gt_area = (gx1 - gx0) * (gy1 - gy0)
    pred_area = (px1 - px0) * (py1 - py0)
    union = gt_area + pred_area - inter

    # smallest enclosing box
    c_area = ((jnp.maximum(gx1, px1) - jnp.minimum(gx0, px0)) *
              (jnp.maximum(gy1, py1) - jnp.minimum(gy0, py0)))

    inv_union = _precise_reciprocal(union)
    inv_c = _precise_reciprocal(c_area)
    # loss = 1 - giou = 1 - iou + (c - union)/c = 2 - inter/union - union/c
    return 2.0 - inter * inv_union - union * inv_c


def _giou_loss_map_kernel(boxes_ref, loss_ref):
    """reduction='none': write the per-element loss tile (padding sliced off later)."""
    loss_ref[...] = _block_loss(boxes_ref).astype(loss_ref.dtype)


def _giou_loss_sum_kernel(boxes_ref, psum_ref, *, n_valid, block_rows):
    """reduction='sum'/'mean': emit one (8,128) sublane partial-sum tile per block."""
    loss = _block_loss(boxes_ref)  # (rb, 128) f32

    i = pl.program_id(0)
    is_last = i == pl.num_programs(0) - 1

    @pl.when(jnp.logical_not(is_last))
    def _():
        # Hot path: pure sublane partial sum (VALU adds only; no XLU reduce,
        # no iota/compare/select).  The wrapper sums the (8,128) tiles.
        psum_ref[...] = loss.reshape(block_rows // 8, 8, _LANES).sum(axis=0)

    @pl.when(is_last)
    def _():
        # Only the last block can contain padded (zero) boxes -> mask them out.
        r = jax.lax.broadcasted_iota(jnp.int32, loss.shape, 0)
        l = jax.lax.broadcasted_iota(jnp.int32, loss.shape, 1)
        # int32 index: fine for up to ~16.7M boxes (2**31 / 128).
        idx = (i * block_rows + r) * _LANES + l
        masked = jnp.where(idx < n_valid, loss, 0.0)
        psum_ref[...] = masked.reshape(block_rows // 8, 8, _LANES).sum(axis=0)


def _block_geometry(r_needed, itemsize):
    """Pick (block_rows, r_pad, num_blocks) for an (8, R, 128) planar input."""
    row_align = {4: 8, 2: 16, 1: 32}.get(itemsize, 8)
    # ~4 MiB per input block (1024 f32 rows / 2048 bf16 rows).
    max_rows = _MAX_BLOCK_BYTES // (8 * _LANES * itemsize)
    max_rows = max(row_align, (max_rows // row_align) * row_align)
    # >=2 balanced blocks whenever there is enough work, so v7x's two
    # TensorCores (each with its own HBM path) both stream.
    if r_needed >= 2 * row_align:
        target_blocks = max(2, _cdiv(r_needed, max_rows))
    else:
        target_blocks = 1
    block_rows = min(max_rows,
                     _cdiv(_cdiv(r_needed, target_blocks), row_align) * row_align)
    r_pad = _cdiv(r_needed, block_rows) * block_rows
    return block_rows, r_pad, r_pad // block_rows


def _giou_loss_pallas(boxes, n, reduction, out_dtype, block_rows, r_pad, num_blocks):
    """boxes: (8, r_pad, 128), coordinate-major planar, r_pad % block_rows == 0."""
    itemsize = jnp.dtype(boxes.dtype).itemsize
    in_spec = pl.BlockSpec((8, block_rows, _LANES), lambda i: (0, i, 0))
    cparams = pltpu.CompilerParams(
        dimension_semantics=("parallel",),
        vmem_limit_bytes=_VMEM_LIMIT_BYTES,
    )
    bytes_in = 8 * r_pad * _LANES * itemsize
    flops = 34 * n
    transcendentals = 2 * n

    if reduction == "none":
        bytes_out = r_pad * _LANES * jnp.dtype(out_dtype).itemsize
        loss = pl.pallas_call(
            _giou_loss_map_kernel,
            out_shape=jax.ShapeDtypeStruct((r_pad, _LANES), out_dtype),
            grid=(num_blocks,),
            in_specs=[in_spec],
            out_specs=pl.BlockSpec((block_rows, _LANES), lambda i: (i, 0)),
            compiler_params=cparams,
            cost_estimate=pl.CostEstimate(
                flops=flops, transcendentals=transcendentals,
                bytes_accessed=bytes_in + bytes_out),
        )(boxes)
        return loss.reshape(-1)[:n]

    bytes_out = 8 * num_blocks * _LANES * 4
    psums = pl.pallas_call(
        functools.partial(_giou_loss_sum_kernel, n_valid=n, block_rows=block_rows),
        out_shape=jax.ShapeDtypeStruct((8, num_blocks * _LANES), jnp.float32),
        grid=(num_blocks,),
        in_specs=[in_spec],
        out_specs=pl.BlockSpec((8, _LANES), lambda i: (0, i)),
        compiler_params=cparams,
        cost_estimate=pl.CostEstimate(
            flops=flops, transcendentals=transcendentals,
            bytes_accessed=bytes_in + bytes_out),
    )(boxes)

    total = jnp.sum(psums)
    if reduction == "sum":
        return total.astype(out_dtype)
    return (total / jnp.float32(n)).astype(out_dtype)


def _planarize(pred_box, gt_box, r_pad):
    """(N,4),(N,4) -> (8, r_pad, 128) coordinate-major, sublane+lane dense."""
    n = pred_box.shape[0]
    boxes = jnp.concatenate([pred_box, gt_box], axis=-1)          # (N, 8)
    boxes = jnp.transpose(boxes)                                   # (8, N)
    boxes = jnp.pad(boxes, ((0, 0), (0, r_pad * _LANES - n)))      # (8, N_pad)
    return boxes.reshape(boxes.shape[0], r_pad, _LANES)


def _giou_loss_xla(pred_box, gt_box, reduction, out_dtype):
    """Fused XLA path for small N (layout pass + kernel launch would dominate)."""
    p = pred_box.astype(jnp.float32)
    g = gt_box.astype(jnp.float32)
    w_i = jnp.clip(jnp.minimum(g[:, 2], p[:, 2]) - jnp.maximum(g[:, 0], p[:, 0]), 0)
    h_i = jnp.clip(jnp.minimum(g[:, 3], p[:, 3]) - jnp.maximum(g[:, 1], p[:, 1]), 0)
    inter = w_i * h_i
    ga = (g[:, 2] - g[:, 0]) * (g[:, 3] - g[:, 1])
    pa = (p[:, 2] - p[:, 0]) * (p[:, 3] - p[:, 1])
    union = ga + pa - inter
    c = ((jnp.maximum(g[:, 2], p[:, 2]) - jnp.minimum(g[:, 0], p[:, 0])) *
         (jnp.maximum(g[:, 3], p[:, 3]) - jnp.minimum(g[:, 1], p[:, 1])))
    loss = 1.0 - (inter / union - (c - union) / c)
    if reduction == "none":
        return loss.astype(out_dtype)
    if reduction == "sum":
        return jnp.sum(loss).astype(out_dtype)
    return jnp.mean(loss).astype(out_dtype)


def giou_loss_planar(boxes, n_valid, reduction="mean"):
    """Pallas GIoU loss on a producer-supplied coordinate-major layout.

    boxes: (8, R, 128); rows 0..3 = pred (x0,y0,x1,y1), rows 4..7 = gt;
    global box index = row*128 + lane; entries >= n_valid are padding.
    Using this entry point skips the wrapper-side concat/transpose/pad
    (the single largest end-to-end HBM lever for this mem-bound kernel).
    """
    assert boxes.ndim == 3 and boxes.shape[0] == 8 and boxes.shape[2] == _LANES
    out_dtype = boxes.dtype
    itemsize = jnp.dtype(out_dtype).itemsize
    r = boxes.shape[1]
    block_rows, r_pad, num_blocks = _block_geometry(r, itemsize)
    if r_pad != r:
        boxes = jnp.pad(boxes, ((0, 0), (0, r_pad - r), (0, 0)))
    return _giou_loss_pallas(boxes, n_valid, reduction, out_dtype,
                             block_rows, r_pad, num_blocks)


def giou_loss(pred_box: jax.Array, gt_box: jax.Array, reduction: str = "mean",
              *, force_pallas: bool = False):
    """pred_box, gt_box: (N, 4) arrays, columns = (xmin, ymin, xmax, ymax)."""
    assert pred_box.shape == gt_box.shape and pred_box.shape[-1] == 4
    assert reduction in ("none", "sum", "mean")
    n = pred_box.shape[0]
    out_dtype = jnp.result_type(pred_box.dtype, gt_box.dtype)

    if n == 0:  # match torch: sum of empty = 0, mean of empty = nan
        if reduction == "none":
            return jnp.zeros((0,), out_dtype)
        if reduction == "sum":
            return jnp.zeros((), out_dtype)
        return jnp.full((), jnp.nan, out_dtype)

    if n < _MIN_PALLAS_BOXES and not force_pallas:
        return _giou_loss_xla(pred_box, gt_box, reduction, out_dtype)

    itemsize = jnp.dtype(out_dtype).itemsize
    r_needed = _cdiv(n, _LANES)
    block_rows, r_pad, num_blocks = _block_geometry(r_needed, itemsize)
    boxes = _planarize(pred_box, gt_box, r_pad)  # (8, r_pad, 128)
    return _giou_loss_pallas(boxes, n, reduction, out_dtype,
                             block_rows, r_pad, num_blocks)


def _giou_loss_ref(pred_box, gt_box, reduction="mean"):
    p = pred_box.astype(jnp.float32)
    g = gt_box.astype(jnp.float32)
    xmin_i = jnp.maximum(g[:, 0], p[:, 0])
    ymin_i = jnp.maximum(g[:, 1], p[:, 1])
    xmax_i = jnp.minimum(g[:, 2], p[:, 2])
    ymax_i = jnp.minimum(g[:, 3], p[:, 3])
    inter = jnp.clip(xmax_i - xmin_i, 0) * jnp.clip(ymax_i - ymin_i, 0)
    ga = (g[:, 2] - g[:, 0]) * (g[:, 3] - g[:, 1])
    pa = (p[:, 2] - p[:, 0]) * (p[:, 3] - p[:, 1])
    union = ga + pa - inter
    iou = inter / union
    c = (jnp.maximum(g[:, 2], p[:, 2]) - jnp.minimum(g[:, 0], p[:, 0])) * (
        jnp.maximum(g[:, 3], p[:, 3]) - jnp.minimum(g[:, 1], p[:, 1]))
    loss = 1.0 - (iou - (c - union) / c)
    if reduction == "none":
        return loss
    if reduction == "sum":
        return jnp.sum(loss)
    return jnp.mean(loss)


if __name__ == "__main__":
    key = jax.random.PRNGKey(0)

    # deterministic, well-formed boxes: (xmin, ymin, xmax, ymax), positive size
    def make_boxes(kmin, kwh, n):
        mins = jax.random.uniform(kmin, (n, 2), minval=0.0, maxval=10.0)
        wh = jax.random.uniform(kwh, (n, 2), minval=1.0, maxval=5.0)
        return jnp.concatenate([mins, mins + wh], axis=-1).astype(jnp.float32)

    k1, k2, k3, k4 = jax.random.split(key, 4)
    N = 8
    pred_box = make_boxes(k1, k2, N)
    gt_box = make_boxes(k3, k4, N)

    # Small N: forced Pallas path (single block, heavy padding + mask) and the
    # default XLA fallback, all three reductions.
    for red in ("mean", "sum", "none"):
        out = giou_loss(pred_box, gt_box, reduction=red, force_pallas=True)
        jax.block_until_ready(out)
        ref = _giou_loss_ref(pred_box, gt_box, reduction=red)
        assert jnp.allclose(out, ref, rtol=1e-5, atol=1e-5), (red, out, ref)

        out_xla = giou_loss(pred_box, gt_box, reduction=red)
        assert jnp.allclose(out_xla, ref, rtol=1e-6, atol=1e-6), (red, out_xla, ref)

    assert giou_loss(pred_box, gt_box, reduction="none",
                     force_pallas=True).shape == (N,)

    # Larger N: natural Pallas dispatch, >=2 grid blocks (parallel axis),
    # last-block masking.
    kb = jax.random.split(jax.random.PRNGKey(1), 4)
    N_big = 40_000
    pred_big = make_boxes(kb[0], kb[1], N_big)
    gt_big = make_boxes(kb[2], kb[3], N_big)

    out_big_none = giou_loss(pred_big, gt_big, reduction="none")
    ref_big_none = _giou_loss_ref(pred_big, gt_big, reduction="none")
    assert out_big_none.shape == (N_big,)
    assert jnp.allclose(out_big_none, ref_big_none, rtol=1e-4, atol=1e-5)

    out_big_mean = giou_loss(pred_big, gt_big, reduction="mean")
    ref_big_mean = _giou_loss_ref(pred_big, gt_big, reduction="mean")
    assert jnp.allclose(out_big_mean, ref_big_mean, rtol=1e-4, atol=1e-4)

    out_big_sum = giou_loss(pred_big, gt_big, reduction="sum")
    ref_big_sum = _giou_loss_ref(pred_big, gt_big, reduction="sum")
    assert jnp.allclose(out_big_sum, ref_big_sum, rtol=1e-4, atol=1e-2)

    jax.block_until_ready(out_big_mean)
    print("KERNEL_OK")
</pallas_src>

<mosaic_0001>
module attributes {stable_mosaic.version = 11 : i64} {
  func.func @_giou_loss_sum_kernel(%arg0: i32, %arg1: memref<8x8x128xf32, #tpu.memory_space<vmem>>, %arg2: memref<8x128xf32, #tpu.memory_space<vmem>>) attributes {dimension_semantics = [#tpu.dimension_semantics<parallel>], iteration_bounds = array<i64: 1>, scalar_prefetch = 0 : i64, scratch_operands = 0 : i64, tpu.core_type = #tpu.core_type<tc>, window_params = [{transform_indices = @transform_0, window_bounds = array<i64: 8, 8, 128>}, {transform_indices = @transform_1, window_bounds = array<i64: 8, 128>}]} {
    %c0 = arith.constant 0 : index
    %c0_0 = arith.constant 0 : index
    %c0_1 = arith.constant 0 : index
    %0 = vector.load %arg1[%c0, %c0_0, %c0_1] : memref<8x8x128xf32, #tpu.memory_space<vmem>>, vector<1x8x128xf32>
    %1 = vector.shape_cast %0 : vector<1x8x128xf32> to vector<8x128xf32>
    %c1 = arith.constant 1 : index
    %c0_2 = arith.constant 0 : index
    %c0_3 = arith.constant 0 : index
    %2 = vector.load %arg1[%c1, %c0_2, %c0_3] : memref<8x8x128xf32, #tpu.memory_space<vmem>>, vector<1x8x128xf32>
    %3 = vector.shape_cast %2 : vector<1x8x128xf32> to vector<8x128xf32>
    %c2 = arith.constant 2 : index
    %c0_4 = arith.constant 0 : index
    %c0_5 = arith.constant 0 : index
    %4 = vector.load %arg1[%c2, %c0_4, %c0_5] : memref<8x8x128xf32, #tpu.memory_space<vmem>>, vector<1x8x128xf32>
    %5 = vector.shape_cast %4 : vector<1x8x128xf32> to vector<8x128xf32>
    %c3 = arith.constant 3 : index
    %c0_6 = arith.constant 0 : index
    %c0_7 = arith.constant 0 : index
    %6 = vector.load %arg1[%c3, %c0_6, %c0_7] : memref<8x8x128xf32, #tpu.memory_space<vmem>>, vector<1x8x128xf32>
    %7 = vector.shape_cast %6 : vector<1x8x128xf32> to vector<8x128xf32>
    %c4 = arith.constant 4 : index
    %c0_8 = arith.constant 0 : index
    %c0_9 = arith.constant 0 : index
    %8 = vector.load %arg1[%c4, %c0_8, %c0_9] : memref<8x8x128xf32, #tpu.memory_space<vmem>>, vector<1x8x128xf32>
    %9 = vector.shape_cast %8 : vector<1x8x128xf32> to vector<8x128xf32>
    %c5 = arith.constant 5 : index
    %c0_10 = arith.constant 0 : index
    %c0_11 = arith.constant 0 : index
    %10 = vector.load %arg1[%c5, %c0_10, %c0_11] : memref<8x8x128xf32, #tpu.memory_space<vmem>>, vector<1x8x128xf32>
    %11 = vector.shape_cast %10 : vector<1x8x128xf32> to vector<8x128xf32>
    %c6 = arith.constant 6 : index
    %c0_12 = arith.constant 0 : index
    %c0_13 = arith.constant 0 : index
    %12 = vector.load %arg1[%c6, %c0_12, %c0_13] : memref<8x8x128xf32, #tpu.memory_space<vmem>>, vector<1x8x128xf32>
    %13 = vector.shape_cast %12 : vector<1x8x128xf32> to vector<8x128xf32>
    %c7 = arith.constant 7 : index
    %c0_14 = arith.constant 0 : index
    %c0_15 = arith.constant 0 : index
    %14 = vector.load %arg1[%c7, %c0_14, %c0_15] : memref<8x8x128xf32, #tpu.memory_space<vmem>>, vector<1x8x128xf32>
    %15 = vector.shape_cast %14 : vector<1x8x128xf32> to vector<8x128xf32>
    %16 = arith.minimumf %13, %5 : vector<8x128xf32>
    %17 = arith.maximumf %9, %1 : vector<8x128xf32>
    %18 = arith.subf %16, %17 : vector<8x128xf32>
    %cst = arith.constant 0.000000e+00 : f32
    %19 = vector.broadcast %cst : f32 to vector<8x128xf32>
    %20 = arith.maximumf %18, %19 : vector<8x128xf32>
    %21 = arith.minimumf %15, %7 : vector<8x128xf32>
    %22 = arith.maximumf %11, %3 : vector<8x128xf32>
    %23 = arith.subf %21, %22 : vector<8x128xf32>
    %cst_16 = arith.constant 0.000000e+00 : f32
    %24 = vector.broadcast %cst_16 : f32 to vector<8x128xf32>
    %25 = arith.maximumf %23, %24 : vector<8x128xf32>
    %26 = arith.mulf %20, %25 : vector<8x128xf32>
    %27 = arith.subf %13, %9 : vector<8x128xf32>
    %28 = arith.subf %15, %11 : vector<8x128xf32>
    %29 = arith.mulf %27, %28 : vector<8x128xf32>
    %30 = arith.subf %5, %1 : vector<8x128xf32>
    %31 = arith.subf %7, %3 : vector<8x128xf32>
    %32 = arith.mulf %30, %31 : vector<8x128xf32>
    %33 = arith.addf %29, %32 : vector<8x128xf32>
    %34 = arith.subf %33, %26 : vector<8x128xf32>
    %35 = arith.maximumf %13, %5 : vector<8x128xf32>
    %36 = arith.minimumf %9, %1 : vector<8x128xf32>
    %37 = arith.subf %35, %36 : vector<8x128xf32>
    %38 = arith.maximumf %15, %7 : vector<8x128xf32>
    %39 = arith.minimumf %11, %3 : vector<8x128xf32>
    %40 = arith.subf %38, %39 : vector<8x128xf32>
    %41 = arith.mulf %37, %40 : vector<8x128xf32>
    %42 = tpu.reciprocal %34 {approx = true} : vector<8x128xf32> -> vector<8x128xf32>
    %43 = arith.mulf %34, %42 : vector<8x128xf32>
    %cst_17 = arith.constant 2.000000e+00 : f32
    %44 = vector.broadcast %cst_17 : f32 to vector<8x128xf32>
    %45 = arith.subf %44, %43 : vector<8x128xf32>
    %46 = arith.mulf %42, %45 : vector<8x128xf32>
    %47 = tpu.reciprocal %41 {approx = true} : vector<8x128xf32> -> vector<8x128xf32>
    %48 = arith.mulf %41, %47 : vector<8x128xf32>
    %cst_18 = arith.constant 2.000000e+00 : f32
    %49 = vector.broadcast %cst_18 : f32 to vector<8x128xf32>
    %50 = arith.subf %49, %48 : vector<8x128xf32>
    %51 = arith.mulf %47, %50 : vector<8x128xf32>
    %52 = arith.mulf %26, %46 : vector<8x128xf32>
    %cst_19 = arith.constant 2.000000e+00 : f32
    %53 = vector.broadcast %cst_19 : f32 to vector<8x128xf32>
    %54 = arith.subf %53, %52 : vector<8x128xf32>
    %55 = arith.mulf %34, %51 : vector<8x128xf32>
    %56 = arith.subf %54, %55 : vector<8x128xf32>
    %c0_i32 = arith.constant 0 : i32
    %57 = arith.cmpi eq, %arg0, %c0_i32 : i32
    %true = arith.constant true
    %58 = arith.xori %57, %true : i1
    %59 = arith.extui %58 : i1 to i32
    %c0_i32_20 = arith.constant 0 : i32
    %60 = arith.cmpi ne, %59, %c0_i32_20 : i32
    scf.if %60 {
      %63 = vector.shape_cast %56 : vector<8x128xf32> to vector<1x8x128xf32>
      %cst_22 = arith.constant dense<0.000000e+00> : vector<8x128xf32>
      %64 = vector.multi_reduction <add>, %63, %cst_22 [0] : vector<1x8x128xf32> to vector<8x128xf32>
      %c0_23 = arith.constant 0 : index
      %c0_24 = arith.constant 0 : index
      %65 = vector.load %arg2[%c0_23, %c0_24] : memref<8x128xf32, #tpu.memory_space<vmem>>, vector<8x128xf32>
      tpu.vector_store %arg2[%c0_23, %c0_24], %64 {strides = array<i32>} : memref<8x128xf32, #tpu.memory_space<vmem>>, vector<8x128xf32>,
    } else {
    }
    %61 = arith.extui %57 : i1 to i32
    %c0_i32_21 = arith.constant 0 : i32
    %62 = arith.cmpi ne, %61, %c0_i32_21 : i32
    scf.if %62 {
      %63 = tpu.iota {dimensions = array<i32: 0>} : vector<8x128xi32>
      %64 = tpu.iota {dimensions = array<i32: 1>} : vector<8x128xi32>
      %c8_i32 = arith.constant 8 : i32
      %65 = arith.muli %arg0, %c8_i32 : i32
      %66 = vector.broadcast %65 : i32 to vector<8x128xi32>
      %67 = arith.addi %66, %63 : vector<8x128xi32>
      %c128_i32 = arith.constant 128 : i32
      %68 = vector.broadcast %c128_i32 : i32 to vector<8x128xi32>
      %69 = arith.muli %67, %68 : vector<8x128xi32>
      %70 = arith.addi %69, %64 : vector<8x128xi32>
      %c8_i32_22 = arith.constant 8 : i32
      %71 = vector.broadcast %c8_i32_22 : i32 to vector<8x128xi32>
      %72 = arith.cmpi slt, %70, %71 : vector<8x128xi32>
      %cst_23 = arith.constant 0.000000e+00 : f32
      %73 = vector.broadcast %cst_23 : f32 to vector<8x128xf32>
      %74 = arith.select %72, %56, %73 : vector<8x128xi1>, vector<8x128xf32>
      %75 = vector.shape_cast %74 : vector<8x128xf32> to vector<1x8x128xf32>
      %cst_24 = arith.constant dense<0.000000e+00> : vector<8x128xf32>
      %76 = vector.multi_reduction <add>, %75, %cst_24 [0] : vector<1x8x128xf32> to vector<8x128xf32>
      %c0_25 = arith.constant 0 : index
      %c0_26 = arith.constant 0 : index
      %77 = vector.load %arg2[%c0_25, %c0_26] : memref<8x128xf32, #tpu.memory_space<vmem>>, vector<8x128xf32>
      tpu.vector_store %arg2[%c0_25, %c0_26], %76 {strides = array<i32>} : memref<8x128xf32, #tpu.memory_space<vmem>>, vector<8x128xf32>,
    } else {
    }
    return
  }
  func.func @transform_0(%arg0: i32) -> (i32, i32, i32) {
    %c0_i32 = arith.constant 0 : i32
    %c0_i32_0 = arith.constant 0 : i32
    %c0_i32_1 = arith.constant 0 : i32
    return %c0_i32, %arg0, %c0_i32_0 : i32, i32, i32
  }
  func.func @transform_1(%arg0: i32) -> (i32, i32) {
    %c0_i32 = arith.constant 0 : i32
    %c0_i32_0 = arith.constant 0 : i32
    return %c0_i32, %arg0 : i32, i32
  }
}

</mosaic_0001>

<llo_original>
// kernel: tpu_custom_call.1
$region0: #{tpu_custom_call.1}
  #allocation0 [shape = 'u32[]', space=smem, size = 0x4, offset = 0x4, fixed_abs, tag = 'smem constant byte address 0x4 - core index']
  #allocation1 [shape = 'u32[144,128]{1,0:T(1,128)}', space=vmem, size = 0x12000, scoped, tag = 'internal scratch']
  %s0 = inlined_call_operand.hbm [shape: f32[8,8,128], index: 0, kind: input, shape index: {}]
  %s1 = inlined_call_operand.hbm [shape: f32[8,128], index: 1, kind: output, shape index: {}]
  %s2 = sld [smem:[#allocation0]]
  $region26: #{tpu_custom_call.1} parent=0
    _
  %s4 = ssub.s32 1, %s2
  %s5 = scalar_select 0, %s4, %s2
  $region1: #{tpu_custom_call.1} parent=0
    #allocation2 [shape = 'u8[32768]{0}', space=vmem, size = 0x8000, scoped, tag = 'input window, operand 0, single buffered']
    #allocation3 [shape = 's32[1]{0}', space=sflag, size = 0x4, scoped, tag = 'scoped memory for tpu_custom_call.1']
    #allocation4 [shape = 's32[1]{0}', space=sflag, size = 0x4, scoped, tag = 'scoped memory for tpu_custom_call.1']
    #allocation5 [shape = 'u8[4096]{0}', space=vmem, size = 0x1000, scoped, tag = 'output window, operand 0, single buffered']
    %6 = vsyncpa [#allocation3], 0
    %7 = vsyncpa [#allocation4], 0
    // Predicated region
    $region2: #{tpu_custom_call.1} parent=1 // pred_check
      _
    $region3: #{tpu_custom_call.1} parent=1 // pred_check_branch
      %9 = sbr.rel (0) target = $region5
    $region4: #{tpu_custom_call.1} parent=1 // pred_region
      %s11 = ssub.s32 1024, 1024
      %12 = vsyncadd [#allocation3], %s11
      %s13 = sshll.u32 [#allocation2], 4
      %s14 = int_to_ptr.vmem [resolvable:$true] %s13
      %19 = dma.hbm_to_vmem [thread:$0]  %s0, 1024, %s14, [#allocation3], 128, 128, 8
    $region5: #{tpu_custom_call.1} parent=1 // pred_fallthru
      _
    // Predicated region
    $region6: #{tpu_custom_call.1} parent=1 // pred_check
      _
    $region7: #{tpu_custom_call.1} parent=1 // pred_check_branch
      %21 = sbr.rel (0) target = $region9
    $region8: #{tpu_custom_call.1} parent=1 // pred_region
      %22 = dma.done [#allocation3], 1024
    $region9: #{tpu_custom_call.1} parent=1 // pred_fallthru
      _
    %v23 = vld [vmem:[#allocation2] sm:$0xff]
    %s24 = scalar_lea.vmem [#allocation2], 8
    %v25 = vld [vmem:[%s24] sm:$0xff]
    %s26 = scalar_lea.vmem [#allocation2], 16
    %v27 = vld [vmem:[%s26] sm:$0xff]
    %s28 = scalar_lea.vmem [#allocation2], 24
    %v29 = vld [vmem:[%s28] sm:$0xff]
    %s30 = scalar_lea.vmem [#allocation2], 32
    %v31 = vld [vmem:[%s30] sm:$0xff]
    %s32 = scalar_lea.vmem [#allocation2], 40
    %v33 = vld [vmem:[%s32] sm:$0xff]
    %s34 = scalar_lea.vmem [#allocation2], 48
    %v35 = vld [vmem:[%s34] sm:$0xff]
    %s36 = scalar_lea.vmem [#allocation2], 56
    %v37 = vld [vmem:[%s36] sm:$0xff]
    %v38 = vmin.f32 %v35, %v27
    %v39 = vmax.f32 %v31, %v23
    %v40 = vsub.f32 %v38, %v39
    %v41 = vmax.f32 %v40, 0.0
    %v42 = vmin.f32 %v37, %v29
    %v43 = vmax.f32 %v33, %v25
    %v44 = vsub.f32 %v42, %v43
    %v45 = vmax.f32 %v44, 0.0
    %v46 = vmul.f32 %v41, %v45
    %v47 = vsub.f32 %v35, %v31
    %v48 = vsub.f32 %v37, %v33
    %v49 = vmul.f32 %v47, %v48
    %v50 = vsub.f32 %v27, %v23
    %v51 = vsub.f32 %v29, %v25
    %v52 = vmul.f32 %v50, %v51
    %v53 = vadd.f32 %v49, %v52
    %v54 = vsub.f32 %v53, %v46
    %v55 = vmax.f32 %v35, %v27
    %v56 = vmin.f32 %v31, %v23
    %v57 = vsub.f32 %v55, %v56
    %v58 = vmax.f32 %v37, %v29
    %v59 = vmin.f32 %v33, %v25
    %v60 = vsub.f32 %v58, %v59
    %v61 = vmul.f32 %v57, %v60
    %v62 = vrcp.pop %v54
    %v63 = vmul.f32 %v54, %v62
    %v64 = vsub.f32 2.0, %v63
    %v65 = vmul.f32 %v62, %v64
    %v66 = vrcp.pop %v61
    %v67 = vmul.f32 %v61, %v66
    %v68 = vsub.f32 2.0, %v67
    %v69 = vmul.f32 %v66, %v68
    %v70 = vmul.f32 %v46, %v65
    %v71 = vsub.f32 2.0, %v70
    %v72 = vmul.f32 %v54, %v69
    %v73 = vsub.f32 %v71, %v72
    %p74 = scmp.eq.s32.totalorder 0, 0
    %p75 = scmp.ne.s32.totalorder 0, 0
    // Predicated region
    $region10: #{tpu_custom_call.1} parent=1 // pred_check
      %p76 = pneg %p75
    $region11: #{tpu_custom_call.1} parent=1 // pred_check_branch
      %78 = sbr.rel (%p76) target = $region13
    $region12: #{tpu_custom_call.1} parent=1 // pred_region
      %v79 = vadd.f32 %v73, 0.0
      %80 = vst [vmem:[#allocation5] sm:$0xff] %v79
    $region13: #{tpu_custom_call.1} parent=1 // pred_fallthru
      _
    // Predicated region
    $region14: #{tpu_custom_call.1} parent=1 // pred_check
      %p81 = pneg %p74
    $region15: #{tpu_custom_call.1} parent=1 // pred_check_branch
      %83 = sbr.rel (%p81) target = $region17
    $region16: #{tpu_custom_call.1} parent=1 // pred_region
      %v84 = vlaneseq
      %v85 = vshrl.u32 %v84, 7
      %v86 = vlaneseq
      %v87 = vand.u32 %v86, 127
      %s88 = smul.u32 0, 8
      %v89 = vstv %s88
      %v90 = vadd.s32 %v89, %v85
      %v91 = vmul.u32 %v90, 128
      %v92 = vadd.s32 %v91, %v87
      %vm93 = vcmp.lt.s32.totalorder %v92, 8
      %v94 = vsel %vm93, %v73, 0.0
      %v95 = vadd.f32 %v94, 0.0
      %96 = vst [vmem:[#allocation5] sm:$0xff] %v95
    $region17: #{tpu_custom_call.1} parent=1 // pred_fallthru
      _
    // Predicated region
    $region18: #{tpu_custom_call.1} parent=1 // pred_check
      _
    $region19: #{tpu_custom_call.1} parent=1 // pred_check_branch
      %98 = sbr.rel (0) target = $region21
    $region20: #{tpu_custom_call.1} parent=1 // pred_region
      %s100 = ssub.s32 128, 128
      %101 = vsyncadd [#allocation4], %s100
      %s103 = sshll.u32 [#allocation5], 4
      %s104 = int_to_ptr.vmem [resolvable:$true] %s103
      %106 = dma.vmem_to_hbm [thread:$0]  %s104, 128, %s1, [#allocation4]
    $region21: #{tpu_custom_call.1} parent=1 // pred_fallthru
      _
    // Predicated region
    $region22: #{tpu_custom_call.1} parent=1 // pred_check
      _
    $region23: #{tpu_custom_call.1} parent=1 // pred_check_branch
      %108 = sbr.rel (0) target = $region25
    $region24: #{tpu_custom_call.1} parent=1 // pred_region
      %109 = dma.done [#allocation4], 128
    $region25: #{tpu_custom_call.1} parent=1 // pred_fallthru
      _
    %110 = vsyncpa [#allocation3], 1
    %111 = vsyncpa [#allocation4], 1

</llo_original>
